<compile_context>
chip_gen: v5e
topology: v5e:2x2
jax: 0.10.0
libtpu: 0.0.40
codegen_flags: <defaults>
</compile_context>

<pallas_src>
import math

import jax
import jax.numpy as jnp
from jax.experimental import pallas as pl
from jax.experimental.pallas import tpu as pltpu


def _round_up(x, m):
    return ((x + m - 1) // m) * m


def _vmem_limit_bytes():
    """Per-chip VMEM budget: ~75% of physical, capped at 100 MiB.
    v5e/v6e (128 MiB) -> 96 MiB, v7x (64 MiB) -> 48 MiB."""
    cap = 64 * 1024 * 1024
    try:
        info = pltpu.get_tpu_info()
        cap = int(info.vmem_capacity_bytes)
    except Exception:
        pass
    return max(32 * 1024 * 1024, min(cap * 3 // 4, 100 * 1024 * 1024))


# --------------------------- Pallas expert kernels ---------------------------
#
# Grouped expert MLP: for each expert e and each tile of its capacity slots,
#   ye = (relu(x @ w1[e] + b1[e]) @ w2[e] + b2[e]) * gate
# The per-slot gate weight is fused into the writeback so the combine step
# outside the kernel is a pure row gather.  Output is bf16; all matmuls use
# bf16 MXU operands with f32 accumulation.

def _expert_mlp_full_kernel(xd_ref, gate_ref, w1_ref, b1_ref, w2_ref, b2_ref,
                            out_ref):
    """Full-FFN variant: grid (E, C tiles); whole (Mp,Fp)/(Fp,Mp) weight blocks,
    no reduction axis, no accumulator scratch.  Weight block index is constant
    across the capacity axis, so weights are fetched once per expert."""
    x = xd_ref[...]                                               # (TC, Mp) bf16
    h = jnp.dot(x, w1_ref[...],
                preferred_element_type=jnp.float32) + b1_ref[...]
    h = jnp.maximum(h, 0.0)                                       # (TC, Fp) f32
    y = jnp.dot(h.astype(w2_ref.dtype), w2_ref[...],
                preferred_element_type=jnp.float32)
    out_ref[...] = ((y + b2_ref[...]) * gate_ref[...]).astype(out_ref.dtype)


def _expert_mlp_ftiled_kernel(xd_ref, gate_ref, w1_ref, b1_ref, w2_ref, b2_ref,
                              out_ref, acc_ref):
    """Large-FFN fallback: grid (E, C tiles, F tiles); FFN axis is the inner
    'arbitrary' reduction into a per-tile f32 VMEM accumulator."""
    f = pl.program_id(2)

    @pl.when(f == 0)
    def _():
        acc_ref[...] = jnp.zeros_like(acc_ref)

    x = xd_ref[...]                                               # (TC, Mp) bf16
    h = jnp.dot(x, w1_ref[...],
                preferred_element_type=jnp.float32) + b1_ref[...]
    h = jnp.maximum(h, 0.0)                                       # (TC, TF) f32
    acc_ref[...] += jnp.dot(h.astype(w2_ref.dtype), w2_ref[...],
                            preferred_element_type=jnp.float32)

    @pl.when(f == pl.num_programs(2) - 1)
    def _():
        out_ref[...] = ((acc_ref[...] + b2_ref[...])
                        * gate_ref[...]).astype(out_ref.dtype)


def _select_tiling(Mp, Fp, capacity, budget, force_f_tiling=False):
    """Pick (tile_c, tile_f).  tile_f == Fp selects the full-weight kernel."""
    cap_aligned = max(16, _round_up(capacity, 16))

    def full_bytes(tc):
        # double-buffered blocks: xd(bf16) + out(bf16) + w1 + w2 (bf16) + small
        return 2 * (2 * tc * Mp * 2 + 2 * Mp * Fp * 2 + (tc + Fp + 2 * Mp) * 4)

    def tiled_bytes(tc, tf):
        return (2 * (2 * tc * Mp * 2 + 2 * Mp * tf * 2 + (tc + tf + 2 * Mp) * 4)
                + tc * Mp * 4)                                    # + acc scratch

    def shrink(tc, fits):
        while tc > 128 and not fits(tc):
            tc = max(128, (tc // 2 // 16) * 16)
        return tc

    if not force_f_tiling:
        tc = min(512, cap_aligned)
        tc = shrink(tc, lambda t: full_bytes(t) <= budget)
        if full_bytes(tc) <= budget:
            return tc, Fp

    tf_candidates = [t for t in (512, 256, 128) if t <= Fp and Fp % t == 0]
    if force_f_tiling:
        tf_candidates = [128]                       # exercise the reduction path
    for tf in tf_candidates:
        tc = min(512, cap_aligned)
        tc = shrink(tc, lambda t, tf=tf: tiled_bytes(t, tf) <= budget)
        if tiled_bytes(tc, tf) <= budget:
            return tc, tf
    return min(128, cap_aligned), 128


def expert_mlp(xd, gate_slot, w1, b1, w2, b2, *, tile_c, tile_f, vmem_limit):
    """xd: [E, Cp, Mp] bf16; gate_slot: [E, Cp, 1] f32; w1: [E, Mp, Fp] bf16;
    b1: [E, 1, Fp] f32; w2: [E, Fp, Mp] bf16; b2: [E, 1, Mp] f32.
    Returns [E, Cp, Mp] bf16 (gate-scaled expert outputs)."""
    E, Cp, Mp = xd.shape
    Fp = w1.shape[2]
    out_shape = jax.ShapeDtypeStruct((E, Cp, Mp), jnp.bfloat16)

    if tile_f >= Fp:
        grid = (E, Cp // tile_c)
        return pl.pallas_call(
            _expert_mlp_full_kernel,
            out_shape=out_shape,
            grid_spec=pltpu.PrefetchScalarGridSpec(
                num_scalar_prefetch=0,
                grid=grid,
                in_specs=[
                    pl.BlockSpec((None, tile_c, Mp), lambda e, c: (e, c, 0)),
                    pl.BlockSpec((None, tile_c, 1), lambda e, c: (e, c, 0)),
                    pl.BlockSpec((None, Mp, Fp), lambda e, c: (e, 0, 0)),
                    pl.BlockSpec((None, 1, Fp), lambda e, c: (e, 0, 0)),
                    pl.BlockSpec((None, Fp, Mp), lambda e, c: (e, 0, 0)),
                    pl.BlockSpec((None, 1, Mp), lambda e, c: (e, 0, 0)),
                ],
                out_specs=pl.BlockSpec((None, tile_c, Mp), lambda e, c: (e, c, 0)),
            ),
            compiler_params=pltpu.CompilerParams(
                dimension_semantics=("parallel", "parallel"),
                vmem_limit_bytes=vmem_limit),
        )(xd, gate_slot, w1, b1, w2, b2)

    grid = (E, Cp // tile_c, Fp // tile_f)
    return pl.pallas_call(
        _expert_mlp_ftiled_kernel,
        out_shape=out_shape,
        grid_spec=pltpu.PrefetchScalarGridSpec(
            num_scalar_prefetch=0,
            grid=grid,
            in_specs=[
                pl.BlockSpec((None, tile_c, Mp), lambda e, c, f: (e, c, 0)),
                pl.BlockSpec((None, tile_c, 1), lambda e, c, f: (e, c, 0)),
                pl.BlockSpec((None, Mp, tile_f), lambda e, c, f: (e, 0, f)),
                pl.BlockSpec((None, 1, tile_f), lambda e, c, f: (e, 0, f)),
                pl.BlockSpec((None, tile_f, Mp), lambda e, c, f: (e, f, 0)),
                pl.BlockSpec((None, 1, Mp), lambda e, c, f: (e, 0, 0)),
            ],
            out_specs=pl.BlockSpec((None, tile_c, Mp), lambda e, c, f: (e, c, 0)),
            scratch_shapes=[pltpu.VMEM((tile_c, Mp), jnp.float32)],
        ),
        compiler_params=pltpu.CompilerParams(
            dimension_semantics=("parallel", "parallel", "arbitrary"),
            vmem_limit_bytes=vmem_limit),
    )(xd, gate_slot, w1, b1, w2, b2)


# ------------------------- Top-1 gating (JAX glue) ---------------------------

def top1_gating_indices(logits, capacity, num_experts):
    """DeepSpeed top1gating (drop_tokens=True, no noise, no used_token), returning
    per-token routing indices instead of dense [S,E,C] one-hot tensors."""
    gates = jax.nn.softmax(logits, axis=1)                        # [S, E]
    expert_idx = jnp.argmax(gates, axis=1)                        # [S]
    mask1 = jax.nn.one_hot(expert_idx, num_experts, dtype=jnp.int32)
    exp_counts = jnp.sum(mask1, axis=0)                           # before drop

    me = jnp.mean(gates, axis=0)
    ce = jnp.mean(mask1.astype(jnp.float32), axis=0)
    l_aux = jnp.sum(me * ce) * num_experts

    locations1 = jnp.cumsum(mask1, axis=0) - 1                    # [S, E]
    kept_mask = mask1 * (locations1 < capacity).astype(mask1.dtype)
    loc_s = jnp.sum(locations1 * kept_mask, axis=1)               # [S]
    kept = jnp.sum(kept_mask, axis=1) > 0                         # [S] bool
    gate_s = jnp.sum(gates * kept_mask.astype(gates.dtype), axis=1)  # 0 if dropped
    return (l_aux, exp_counts, expert_idx.astype(jnp.int32),
            loc_s.astype(jnp.int32), kept, gate_s)


# ------------------------------ MoE wrapper ----------------------------------

class MoEPallas:
    """Single-device (expert_parallel_world_size == 1), top-1 DeepSpeed MoE.
    Expert module = Linear(hidden, ffn) -> ReLU -> Linear(ffn, hidden)."""

    def __init__(self, hidden_size, ffn_size, num_experts=1, k=1,
                 capacity_factor=1.0, eval_capacity_factor=1.0,
                 min_capacity=4, noisy_gate_policy=None, drop_tokens=True,
                 seed=0):
        assert k == 1, "only top-1 gating implemented"
        assert noisy_gate_policy in (None, "None")  # TODO(synk): Jitter/RSample
        assert drop_tokens                          # TODO(synk): drop_tokens=False
        self.hidden = hidden_size
        self.ffn = ffn_size
        self.num_experts = num_experts
        self.capacity_factor = capacity_factor
        self.eval_capacity_factor = eval_capacity_factor  # TODO(synk): eval capacity
        self.min_capacity = min_capacity
        self.vmem_limit = _vmem_limit_bytes()
        self.force_f_tiling = False   # debug/test switch for the large-FFN path

        E, M, F = num_experts, hidden_size, ffn_size
        # 256-aligned padding for the 256-wide MXU on v6e/v7x.
        Mp, Fp = _round_up(M, 256), _round_up(F, 256)
        self.Mp, self.Fp = Mp, Fp

        key = jax.random.PRNGKey(seed)
        k_wg, k_w1, k_b1, k_w2, k_b2 = jax.random.split(key, 5)
        # TopKGate.wg : Linear(hidden, num_experts, bias=False); gate runs in f32.
        self.wg = jax.random.normal(k_wg, (M, E), jnp.float32) * 0.02
        # Logical (unpadded) f32 expert parameters (used by the reference check).
        self.w1 = jax.random.normal(k_w1, (E, M, F), jnp.float32) * 0.02
        self.b1 = jax.random.normal(k_b1, (E, 1, F), jnp.float32) * 0.02
        self.w2 = jax.random.normal(k_w2, (E, F, M), jnp.float32) * 0.02
        self.b2 = jax.random.normal(k_b2, (E, 1, M), jnp.float32) * 0.02
        # Kernel copies: zero-padded, matmul weights bf16 in HBM, biases f32.
        # TODO(synk): optional fp8 (v7x) / int8 (v5e,v6e) weight storage with
        # per-channel scales applied in the epilogue.
        self.w1_p = jnp.pad(self.w1, ((0, 0), (0, Mp - M), (0, Fp - F))).astype(jnp.bfloat16)
        self.b1_p = jnp.pad(self.b1, ((0, 0), (0, 0), (0, Fp - F)))
        self.w2_p = jnp.pad(self.w2, ((0, 0), (0, Fp - F), (0, Mp - M))).astype(jnp.bfloat16)
        self.b2_p = jnp.pad(self.b2, ((0, 0), (0, 0), (0, Mp - M)))

    def _capacity(self, num_tokens):
        cap = int(math.ceil((num_tokens / self.num_experts) * self.capacity_factor))
        return max(cap, self.min_capacity)

    def __call__(self, hidden_states, used_token=None):
        # TODO(synk): used_token masking and cross-device all-to-all (expert
        # parallelism) are not implemented (single expert-parallel rank).
        d_model = hidden_states.shape[-1]
        x = hidden_states.reshape(-1, d_model).astype(jnp.float32)     # [S, M]
        S, M = x.shape
        E = self.num_experts
        Mp, Fp = self.Mp, self.Fp
        capacity = self._capacity(S)

        # ---- gating (tiny; plain XLA) ----
        logits = x @ self.wg                                           # [S, E]
        l_aux, exp_counts, e_idx, loc_s, kept, gate_s = top1_gating_indices(
            logits, capacity, E)

        # ---- tiling geometry: sized from the per-chip VMEM budget ----
        budget = int(self.vmem_limit * 0.85)
        tile_c, tile_f = _select_tiling(Mp, Fp, capacity, budget,
                                        force_f_tiling=self.force_f_tiling)
        Cp = _round_up(capacity, tile_c)

        # ---- dispatch: index-based gather (no dense [S,E,C] matmuls) ----
        # Capacity-grid slot of each kept token; dropped tokens park on a
        # sentinel slot that is trimmed away.
        slot = jnp.where(kept, e_idx * Cp + loc_s, E * Cp)             # [S]
        src = (jnp.full((E * Cp + 1,), S, jnp.int32)
               .at[slot].set(jnp.arange(S, dtype=jnp.int32))[:E * Cp])
        gate_slot = (jnp.zeros((E * Cp + 1,), jnp.float32)
                     .at[slot].set(gate_s)[:E * Cp]).reshape(E, Cp, 1)
        # TODO(synk): at production sizes this token gather can be moved inside
        # the kernel (scalar-prefetched `src` + manual per-row DMA from HBM),
        # removing a full write+read of the dispatched activations.
        x_pad = jnp.pad(x, ((0, 1), (0, Mp - M))).astype(jnp.bfloat16)  # [S+1, Mp]
        xd = jnp.take(x_pad, src, axis=0).reshape(E, Cp, Mp)            # [E, Cp, Mp]

        # ---- expert MLP (Pallas grouped GEMM, gate scaling fused, bf16 out) ----
        ye = expert_mlp(xd, gate_slot, self.w1_p, self.b1_p, self.w2_p,
                        self.b2_p, tile_c=tile_c, tile_f=tile_f,
                        vmem_limit=self.vmem_limit)                     # [E,Cp,Mp] bf16

        # ---- combine: gather each token's (already gate-scaled) row ----
        # In-range slot for every token (loc_s == 0 for dropped tokens); dropped
        # tokens are zeroed by the jnp.where mask — no concatenate/extra copy.
        slot_in = e_idx * Cp + loc_s                                    # [S]
        gathered = jnp.take(ye.reshape(E * Cp, Mp), slot_in, axis=0)[:, :M]
        out = jnp.where(kept[:, None], gathered, jnp.zeros((), gathered.dtype))

        output = out.reshape(hidden_states.shape).astype(hidden_states.dtype)
        return output, l_aux, exp_counts


# --------------------------- reference (pure JAX) -----------------------------

def reference_forward(moe, hidden_states):
    """Dense-einsum DeepSpeed formulation; bf16 matmul operands with f32
    accumulation to match the kernel's MXU precision."""
    d_model = hidden_states.shape[-1]
    x = hidden_states.reshape(-1, d_model).astype(jnp.float32)
    S = x.shape[0]
    E = moe.num_experts
    capacity = moe._capacity(S)
    logits = x @ moe.wg
    l_aux, exp_counts, e_idx, loc_s, kept, gate_s = top1_gating_indices(
        logits, capacity, E)

    sec = (jax.nn.one_hot(e_idx, E, dtype=jnp.float32)[:, :, None]
           * jax.nn.one_hot(loc_s, capacity, dtype=jnp.float32)[:, None, :]
           * kept.astype(jnp.float32)[:, None, None])                   # [S,E,C]
    dispatched = jnp.einsum("sec,sm->ecm", sec, x)                      # [E,C,M]
    h = jnp.einsum("ecm,emf->ecf", dispatched.astype(jnp.bfloat16),
                   moe.w1.astype(jnp.bfloat16),
                   preferred_element_type=jnp.float32) + moe.b1
    h = jnp.maximum(h, 0.0)
    ye = jnp.einsum("ecf,efm->ecm", h.astype(jnp.bfloat16),
                    moe.w2.astype(jnp.bfloat16),
                    preferred_element_type=jnp.float32) + moe.b2
    combine = sec * gate_s[:, None, None]
    out = jnp.einsum("sec,ecm->sm", combine, ye)
    return out.reshape(hidden_states.shape), l_aux, exp_counts


# ----------------------------------- main -------------------------------------

if __name__ == "__main__":
    batch, seq, hidden, ffn, num_experts = 2, 8, 32, 64, 4

    key = jax.random.PRNGKey(0)
    hidden_states = jax.random.normal(key, (batch, seq, hidden), jnp.float32)

    moe = MoEPallas(hidden_size=hidden, ffn_size=ffn, num_experts=num_experts,
                    k=1, capacity_factor=1.0, min_capacity=4, seed=0)

    ref_out, ref_laux, ref_counts = reference_forward(moe, hidden_states)

    # Path 1: full-weight kernel (weights fit in VMEM, no FFN reduction axis).
    output, l_aux, exp_counts = moe(hidden_states)
    jax.block_until_ready(output)
    jax.block_until_ready(l_aux)
    jax.block_until_ready(exp_counts)
    assert output.shape == hidden_states.shape
    assert jnp.allclose(output, ref_out, atol=1e-2, rtol=1e-2), \
        float(jnp.max(jnp.abs(output - ref_out)))
    assert jnp.allclose(l_aux, ref_laux, atol=1e-6)
    assert jnp.array_equal(exp_counts, ref_counts)

    # Path 2: f-tiled kernel (large-FFN fallback with the f32 VMEM accumulator).
    moe.force_f_tiling = True
    output2, l_aux2, exp_counts2 = moe(hidden_states)
    jax.block_until_ready(output2)
    assert jnp.allclose(output2, ref_out, atol=1e-2, rtol=1e-2), \
        float(jnp.max(jnp.abs(output2 - ref_out)))
    assert jnp.allclose(l_aux2, ref_laux, atol=1e-6)
    assert jnp.array_equal(exp_counts2, ref_counts)

    print("KERNEL_OK")
</pallas_src>

<mosaic_0001>
module attributes {stable_mosaic.version = 11 : i64} {
  func.func @_expert_mlp_full_kernel(%arg0: i32, %arg1: i32, %arg2: memref<1x16x256xbf16, #tpu.memory_space<vmem>>, %arg3: memref<1x16x1xf32, #tpu.memory_space<vmem>>, %arg4: memref<1x256x256xbf16, #tpu.memory_space<vmem>>, %arg5: memref<1x1x256xf32, #tpu.memory_space<vmem>>, %arg6: memref<1x256x256xbf16, #tpu.memory_space<vmem>>, %arg7: memref<1x1x256xf32, #tpu.memory_space<vmem>>, %arg8: memref<1x16x256xbf16, #tpu.memory_space<vmem>>) attributes {dimension_semantics = [#tpu.dimension_semantics<parallel>, #tpu.dimension_semantics<parallel>], iteration_bounds = array<i64: 4, 1>, scalar_prefetch = 0 : i64, scratch_operands = 0 : i64, tpu.core_type = #tpu.core_type<tc>, window_params = [{transform_indices = @transform_0, window_bounds = array<i64: 1, 16, 256>}, {transform_indices = @transform_1, window_bounds = array<i64: 1, 16, 1>}, {transform_indices = @transform_2, window_bounds = array<i64: 1, 256, 256>}, {transform_indices = @transform_3, window_bounds = array<i64: 1, 1, 256>}, {transform_indices = @transform_4, window_bounds = array<i64: 1, 256, 256>}, {transform_indices = @transform_5, window_bounds = array<i64: 1, 1, 256>}, {transform_indices = @transform_6, window_bounds = array<i64: 1, 16, 256>}]} {
    %c0 = arith.constant 0 : index
    %c0_0 = arith.constant 0 : index
    %c0_1 = arith.constant 0 : index
    %0 = vector.load %arg2[%c0, %c0_0, %c0_1] : memref<1x16x256xbf16, #tpu.memory_space<vmem>>, vector<1x16x256xbf16>
    %1 = vector.shape_cast %0 : vector<1x16x256xbf16> to vector<16x256xbf16>
    %c0_2 = arith.constant 0 : index
    %c0_3 = arith.constant 0 : index
    %c0_4 = arith.constant 0 : index
    %2 = vector.load %arg4[%c0_2, %c0_3, %c0_4] : memref<1x256x256xbf16, #tpu.memory_space<vmem>>, vector<1x256x256xbf16>
    %3 = vector.shape_cast %2 : vector<1x256x256xbf16> to vector<256x256xbf16>
    %cst = arith.constant dense<0.000000e+00> : vector<16x256xf32>
    %4 = tpu.matmul %1, %3, %cst {dimension_numbers = #tpu.dot_dimension_numbers<[1], [0], [0], [1], [0, 0, 1, 1], [], []>} : vector<16x256xbf16>, vector<256x256xbf16>, vector<16x256xf32> -> vector<16x256xf32>
    %c0_5 = arith.constant 0 : index
    %c0_6 = arith.constant 0 : index
    %c0_7 = arith.constant 0 : index
    %5 = vector.load %arg5[%c0_5, %c0_6, %c0_7] : memref<1x1x256xf32, #tpu.memory_space<vmem>>, vector<1x1x256xf32>
    %6 = vector.shape_cast %5 : vector<1x1x256xf32> to vector<1x256xf32>
    %7 = vector.broadcast %6 : vector<1x256xf32> to vector<16x256xf32>
    %8 = arith.addf %4, %7 : vector<16x256xf32>
    %cst_8 = arith.constant 0.000000e+00 : f32
    %9 = vector.broadcast %cst_8 : f32 to vector<16x256xf32>
    %10 = arith.maximumf %8, %9 : vector<16x256xf32>
    %11 = arith.truncf %10 : vector<16x256xf32> to vector<16x256xbf16>
    %c0_9 = arith.constant 0 : index
    %c0_10 = arith.constant 0 : index
    %c0_11 = arith.constant 0 : index
    %12 = vector.load %arg6[%c0_9, %c0_10, %c0_11] : memref<1x256x256xbf16, #tpu.memory_space<vmem>>, vector<1x256x256xbf16>
    %13 = vector.shape_cast %12 : vector<1x256x256xbf16> to vector<256x256xbf16>
    %cst_12 = arith.constant dense<0.000000e+00> : vector<16x256xf32>
    %14 = tpu.matmul %11, %13, %cst_12 {dimension_numbers = #tpu.dot_dimension_numbers<[1], [0], [0], [1], [0, 0, 1, 1], [], []>} : vector<16x256xbf16>, vector<256x256xbf16>, vector<16x256xf32> -> vector<16x256xf32>
    %c0_13 = arith.constant 0 : index
    %c0_14 = arith.constant 0 : index
    %c0_15 = arith.constant 0 : index
    %15 = vector.load %arg7[%c0_13, %c0_14, %c0_15] : memref<1x1x256xf32, #tpu.memory_space<vmem>>, vector<1x1x256xf32>
    %16 = vector.shape_cast %15 : vector<1x1x256xf32> to vector<1x256xf32>
    %17 = vector.broadcast %16 : vector<1x256xf32> to vector<16x256xf32>
    %18 = arith.addf %14, %17 : vector<16x256xf32>
    %c0_16 = arith.constant 0 : index
    %c0_17 = arith.constant 0 : index
    %c0_18 = arith.constant 0 : index
    %19 = vector.load %arg3[%c0_16, %c0_17, %c0_18] : memref<1x16x1xf32, #tpu.memory_space<vmem>>, vector<1x16x1xf32>
    %20 = vector.shape_cast %19 : vector<1x16x1xf32> to vector<16x1xf32>
    %21 = vector.broadcast %20 : vector<16x1xf32> to vector<16x256xf32>
    %22 = arith.mulf %18, %21 : vector<16x256xf32>
    %23 = arith.truncf %22 : vector<16x256xf32> to vector<16x256xbf16>
    %c0_19 = arith.constant 0 : index
    %c0_20 = arith.constant 0 : index
    %c0_21 = arith.constant 0 : index
    %24 = vector.load %arg8[%c0_19, %c0_20, %c0_21] : memref<1x16x256xbf16, #tpu.memory_space<vmem>>, vector<1x16x256xbf16>
    %25 = vector.shape_cast %24 : vector<1x16x256xbf16> to vector<16x256xbf16>
    %26 = vector.shape_cast %23 : vector<16x256xbf16> to vector<1x16x256xbf16>
    tpu.vector_store %arg8[%c0_19, %c0_20, %c0_21], %26 {strides = array<i32>} : memref<1x16x256xbf16, #tpu.memory_space<vmem>>, vector<1x16x256xbf16>,
    return
  }
  func.func @transform_0(%arg0: i32, %arg1: i32) -> (i32, i32, i32) {
    %c0_i32 = arith.constant 0 : i32
    %c0_i32_0 = arith.constant 0 : i32
    return %arg0, %arg1, %c0_i32 : i32, i32, i32
  }
  func.func @transform_1(%arg0: i32, %arg1: i32) -> (i32, i32, i32) {
    %c0_i32 = arith.constant 0 : i32
    %c0_i32_0 = arith.constant 0 : i32
    return %arg0, %arg1, %c0_i32 : i32, i32, i32
  }
  func.func @transform_2(%arg0: i32, %arg1: i32) -> (i32, i32, i32) {
    %c0_i32 = arith.constant 0 : i32
    %c0_i32_0 = arith.constant 0 : i32
    %c0_i32_1 = arith.constant 0 : i32
    return %arg0, %c0_i32, %c0_i32_0 : i32, i32, i32
  }
  func.func @transform_3(%arg0: i32, %arg1: i32) -> (i32, i32, i32) {
    %c0_i32 = arith.constant 0 : i32
    %c0_i32_0 = arith.constant 0 : i32
    %c0_i32_1 = arith.constant 0 : i32
    return %arg0, %c0_i32, %c0_i32_0 : i32, i32, i32
  }
  func.func @transform_4(%arg0: i32, %arg1: i32) -> (i32, i32, i32) {
    %c0_i32 = arith.constant 0 : i32
    %c0_i32_0 = arith.constant 0 : i32
    %c0_i32_1 = arith.constant 0 : i32
    return %arg0, %c0_i32, %c0_i32_0 : i32, i32, i32
  }
  func.func @transform_5(%arg0: i32, %arg1: i32) -> (i32, i32, i32) {
    %c0_i32 = arith.constant 0 : i32
    %c0_i32_0 = arith.constant 0 : i32
    %c0_i32_1 = arith.constant 0 : i32
    return %arg0, %c0_i32, %c0_i32_0 : i32, i32, i32
  }
  func.func @transform_6(%arg0: i32, %arg1: i32) -> (i32, i32, i32) {
    %c0_i32 = arith.constant 0 : i32
    %c0_i32_0 = arith.constant 0 : i32
    return %arg0, %arg1, %c0_i32 : i32, i32, i32
  }
}

</mosaic_0001>

<llo_original>
// kernel: tpu_custom_call.1
$region0: #{tpu_custom_call.1}
  #allocation0 [shape = 'u32[]', space=smem, size = 0x4, offset = 0x4, fixed_abs, tag = 'smem constant byte address 0x4 - core index']
  #allocation1 [shape = 'u32[72,128]{1,0:T(1,128)}', space=vmem, size = 0x9000, scoped, tag = 'internal scratch']
  %s0 = inlined_call_operand.vmem [shape: bf16[4,16,256], index: 0, kind: input, shape index: {}]
  %s1 = inlined_call_operand.vmem [shape: f32[4,16,1], index: 1, kind: input, shape index: {}]
  %s2 = inlined_call_operand.hbm [shape: bf16[4,256,256], index: 2, kind: input, shape index: {}]
  %s3 = inlined_call_operand.hbm [shape: f32[4,1,256], index: 3, kind: input, shape index: {}]
  %s4 = inlined_call_operand.hbm [shape: bf16[4,256,256], index: 4, kind: input, shape index: {}]
  %s5 = inlined_call_operand.vmem [shape: f32[4,1,256], index: 5, kind: input, shape index: {}]
  %s6 = inlined_call_operand.hbm [shape: bf16[4,16,256], index: 6, kind: output, shape index: {}]
  %s7 = sld [smem:[#allocation0]]
  $region69: #{tpu_custom_call.1} parent=0
    _
  %s9 = ssub.s32 1, %s7
  %s10 = scalar_select 0, %s9, %s7
  $region1: #{tpu_custom_call.1} parent=0
    #allocation2 [shape = 'u8[262144]{0}', space=vmem, size = 0x40000, scoped, tag = 'input window, operand 2']
    #allocation3 [shape = 's32[2]{0}', space=sflag, size = 0x8, scoped, tag = 'scoped memory for tpu_custom_call.1']
    #allocation4 [shape = 's32[2]{0}', space=sflag, size = 0x8, scoped, tag = 'scoped memory for tpu_custom_call.1']
    #allocation5 [shape = 'u8[2048]{0}', space=vmem, size = 0x800, scoped, tag = 'input window, operand 3']
    #allocation6 [shape = 's32[2]{0}', space=sflag, size = 0x8, scoped, tag = 'scoped memory for tpu_custom_call.1']
    #allocation7 [shape = 'u8[262144]{0}', space=vmem, size = 0x40000, scoped, tag = 'input window, operand 4']
    #allocation8 [shape = 'u8[16384]{0}', space=vmem, size = 0x4000, scoped, tag = 'output window, operand 0']
    %11 = vsyncpa [#allocation3], 0
    %s12 = scalar_lea.sflag [#allocation3], 1
    %13 = vsyncpa %s12, 0
    %14 = vsyncpa [#allocation6], 0
    %s15 = scalar_lea.sflag [#allocation6], 1
    %16 = vsyncpa %s15, 0
    %17 = vsyncpa [#allocation4], 0
    %s18 = scalar_lea.sflag [#allocation4], 1
    %19 = vsyncpa %s18, 0
    loop: start=0, step=1, limit=6
    $region2: #{tpu_custom_call.1} parent=1 // loop_pre_header
      _
    $region3: #{tpu_custom_call.1} parent=1 // loop_header
      %s21 = sphi 0, %s25
      %p22 = scmp.ge.s32.totalorder %s21, 6
      %s28 = sphi 0, %s40
      %s29 = sphi 0, %s36
      %s30 = sphi 0, %s28
      %s31 = sphi 0, %s29
      %s32 = sphi 0, %s30
      %s33 = sphi 0, %s31
      %s45 = sphi 0, %s47
      %s48 = sphi 0, %s45
      %s49 = sphi 0, %s48
      %s65 = sphi 0, %s49
      %s73 = sphi 0, %s75
      %s76 = sphi 0, %s73
      %s77 = sphi 0, %s76
      %s93 = sphi 0, %s77
      %s99 = sphi 0, %s101
      %s102 = sphi 0, %s99
      %s103 = sphi 0, %s102
      %s119 = sphi 0, %s103
      %s125 = sphi 0, %s127
      %s128 = sphi 0, %s125
      %s129 = sphi 0, %s128
      %s145 = sphi 0, %s129
      %s151 = sphi 0, %s153
      %s154 = sphi 0, %s151
      %s155 = sphi 0, %s154
      %s171 = sphi 0, %s155
      %s177 = sphi 0, %s179
      %s180 = sphi 0, %s177
      %s181 = sphi 0, %s180
      %s197 = sphi 0, %s181
      %s205 = sphi 0, %s207
      %s208 = sphi 0, %s205
      %s209 = sphi 0, %s208
      %s225 = sphi 0, %s209
    $region4: #{tpu_custom_call.1} parent=1 // loop_header_branch
      %24 = sbr.rel (%p22) target = $region8
    $region5: #{tpu_custom_call.1} parent=1 // loop_body
      %s26 = ssub.s32 %s21, 1
      %s27 = ssub.s32 %s21, 2
      %s34 = sadd.s32 1, %s29
      %p35 = scmp.ge.s32.totalorder %s34, 1
      %s36 = scalar_select %p35, 0, %s34
      %s37 = sadd.s32 1, %s28
      %s38 = scalar_select %p35, %s37, %s28
      %p39 = scmp.ge.s32.totalorder %s38, 4
      %s40 = scalar_select %p39, 0, %s38
      %s41 = ssub.s32 %s28, %s40
      %s42 = ssub.s32 %s29, %s36
      %s43 = sor.u32 %s41, %s42
      %p44 = scmp.eq.s32.totalorder %s43, 0
      %s46 = sadd.s32 %s45, 1
      %s47 = scalar_select %p44, %s45, %s46
      %p50 = pneg %p44
      %p51 = scmp.eq.s32.totalorder %s21, 3
      %p52 = por %p50, %p51
      %p53 = scmp.ne.s32.totalorder %s45, %s48
      %p54 = scmp.eq.s32.totalorder %s21, 0
      %p55 = por %p53, %p54
      %p56 = scmp.ne.s32.totalorder %s45, %s48
      %p57 = scmp.eq.s32.totalorder %s26, 3
      %p58 = por %p56, %p57
      %p59 = scmp.ne.s32.totalorder %s48, %s49
      %p60 = scmp.eq.s32.totalorder %s26, 0
      %p61 = por %p59, %p60
      %p62 = scmp.ne.s32.totalorder %s48, %s49
      %p63 = scmp.eq.s32.totalorder %s27, 3
      %p64 = por %p62, %p63
      %p66 = scmp.ne.s32.totalorder %s49, %s65
      %p67 = scmp.eq.s32.totalorder %s27, 0
      %p68 = por %p66, %p67
      %s69 = ssub.s32 %s28, %s40
      %s70 = ssub.s32 %s29, %s36
      %s71 = sor.u32 %s69, %s70
      %p72 = scmp.eq.s32.totalorder %s71, 0
      %s74 = sadd.s32 %s73, 1
      %s75 = scalar_select %p72, %s73, %s74
      %p78 = pneg %p72
      %p79 = scmp.eq.s32.totalorder %s21, 3
      %p80 = por %p78, %p79
      %p81 = scmp.ne.s32.totalorder %s73, %s76
      %p82 = scmp.eq.s32.totalorder %s21, 0
      %p83 = por %p81, %p82
      %p84 = scmp.ne.s32.totalorder %s73, %s76
      %p85 = scmp.eq.s32.totalorder %s26, 3
      %p86 = por %p84, %p85
      %p87 = scmp.ne.s32.totalorder %s76, %s77
      %p88 = scmp.eq.s32.totalorder %s26, 0
      %p89 = por %p87, %p88
      %p90 = scmp.ne.s32.totalorder %s76, %s77
      %p91 = scmp.eq.s32.totalorder %s27, 3
      %p92 = por %p90, %p91
      %p94 = scmp.ne.s32.totalorder %s77, %s93
      %p95 = scmp.eq.s32.totalorder %s27, 0
      %p96 = por %p94, %p95
      %s97 = ssub.s32 %s28, %s40
      %p98 = scmp.eq.s32.totalorder %s97, 0
      %s100 = sadd.s32 %s99, 1
      %s101 = scalar_select %p98, %s99, %s100
      %p104 = pneg %p98
      %p105 = scmp.eq.s32.totalorder %s21, 3
      %p106 = por %p104, %p105
      %p107 = scmp.ne.s32.totalorder %s99, %s102
      %p108 = scmp.eq.s32.totalorder %s21, 0
      %p109 = por %p107, %p108
      %p110 = scmp.ne.s32.totalorder %s99, %s102
      %p111 = scmp.eq.s32.totalorder %s26, 3
      %p112 = por %p110, %p111
      %p113 = scmp.ne.s32.totalorder %s102, %s103
      %p114 = scmp.eq.s32.totalorder %s26, 0
      %p115 = por %p113, %p114
      %p116 = scmp.ne.s32.totalorder %s102, %s103
      %p117 = scmp.eq.s32.totalorder %s27, 3
      %p118 = por %p116, %p117
      %p120 = scmp.ne.s32.totalorder %s103, %s119
      %p121 = scmp.eq.s32.totalorder %s27, 0
      %p122 = por %p120, %p121
      %s123 = ssub.s32 %s28, %s40
      %p124 = scmp.eq.s32.totalorder %s123, 0
      %s126 = sadd.s32 %s125, 1
      %s127 = scalar_select %p124, %s125, %s126
      %p130 = pneg %p124
      %p131 = scmp.eq.s32.totalorder %s21, 3
      %p132 = por %p130, %p131
      %p133 = scmp.ne.s32.totalorder %s125, %s128
      %p134 = scmp.eq.s32.totalorder %s21, 0
      %p135 = por %p133, %p134
      %p136 = scmp.ne.s32.totalorder %s125, %s128
      %p137 = scmp.eq.s32.totalorder %s26, 3
      %p138 = por %p136, %p137
      %p139 = scmp.ne.s32.totalorder %s128, %s129
      %p140 = scmp.eq.s32.totalorder %s26, 0
      %p141 = por %p139, %p140
      %p142 = scmp.ne.s32.totalorder %s128, %s129
      %p143 = scmp.eq.s32.totalorder %s27, 3
      %p144 = por %p142, %p143
      %p146 = scmp.ne.s32.totalorder %s129, %s145
      %p147 = scmp.eq.s32.totalorder %s27, 0
      %p148 = por %p146, %p147
      %s149 = ssub.s32 %s28, %s40
      %p150 = scmp.eq.s32.totalorder %s149, 0
      %s152 = sadd.s32 %s151, 1
      %s153 = scalar_select %p150, %s151, %s152
      %p156 = pneg %p150
      %p157 = scmp.eq.s32.totalorder %s21, 3
      %p158 = por %p156, %p157
      %p159 = scmp.ne.s32.totalorder %s151, %s154
      %p160 = scmp.eq.s32.totalorder %s21, 0
      %p161 = por %p159, %p160
      %p162 = scmp.ne.s32.totalorder %s151, %s154
      %p163 = scmp.eq.s32.totalorder %s26, 3
      %p164 = por %p162, %p163
      %p165 = scmp.ne.s32.totalorder %s154, %s155
      %p166 = scmp.eq.s32.totalorder %s26, 0
      %p167 = por %p165, %p166
      %p168 = scmp.ne.s32.totalorder %s154, %s155
      %p169 = scmp.eq.s32.totalorder %s27, 3
      %p170 = por %p168, %p169
      %p172 = scmp.ne.s32.totalorder %s155, %s171
      %p173 = scmp.eq.s32.totalorder %s27, 0
      %p174 = por %p172, %p173
      %s175 = ssub.s32 %s28, %s40
      %p176 = scmp.eq.s32.totalorder %s175, 0
      %s178 = sadd.s32 %s177, 1
      %s179 = scalar_select %p176, %s177, %s178
      %p182 = pneg %p176
      %p183 = scmp.eq.s32.totalorder %s21, 3
      %p184 = por %p182, %p183
      %p185 = scmp.ne.s32.totalorder %s177, %s180
      %p186 = scmp.eq.s32.totalorder %s21, 0
      %p187 = por %p185, %p186
      %p188 = scmp.ne.s32.totalorder %s177, %s180
      %p189 = scmp.eq.s32.totalorder %s26, 3
      %p190 = por %p188, %p189
      %p191 = scmp.ne.s32.totalorder %s180, %s181
      %p192 = scmp.eq.s32.totalorder %s26, 0
      %p193 = por %p191, %p192
      %p194 = scmp.ne.s32.totalorder %s180, %s181
      %p195 = scmp.eq.s32.totalorder %s27, 3
      %p196 = por %p194, %p195
      %p198 = scmp.ne.s32.totalorder %s181, %s197
      %p199 = scmp.eq.s32.totalorder %s27, 0
      %p200 = por %p198, %p199
      %s201 = ssub.s32 %s28, %s40
      %s202 = ssub.s32 %s29, %s36
      %s203 = sor.u32 %s201, %s202
      %p204 = scmp.eq.s32.totalorder %s203, 0
      %s206 = sadd.s32 %s205, 1
      %s207 = scalar_select %p204, %s205, %s206
      %p210 = pneg %p204
      %p211 = scmp.eq.s32.totalorder %s21, 3
      %p212 = por %p210, %p211
      %p213 = scmp.ne.s32.totalorder %s205, %s208
      %p214 = scmp.eq.s32.totalorder %s21, 0
      %p215 = por %p213, %p214
      %p216 = scmp.ne.s32.totalorder %s205, %s208
      %p217 = scmp.eq.s32.totalorder %s26, 3
      %p218 = por %p216, %p217
      %p219 = scmp.ne.s32.totalorder %s208, %s209
      %p220 = scmp.eq.s32.totalorder %s26, 0
      %p221 = por %p219, %p220
      %p222 = scmp.ne.s32.totalorder %s208, %s209
      %p223 = scmp.eq.s32.totalorder %s27, 3
      %p224 = por %p222, %p223
      %p226 = scmp.ne.s32.totalorder %s209, %s225
      %p227 = scmp.eq.s32.totalorder %s27, 0
      %p228 = por %p226, %p227
      %p229 = scmp.le.s32.totalorder 1, %s21
      %p230 = scmp.lt.s32.totalorder %s21, 5
      %p231 = pnand %p229, %p230
      %p232 = pneg %p231
      // Predicated region
      $region9: #{tpu_custom_call.1} parent=5 // pred_check
        _
      $region10: #{tpu_custom_call.1} parent=5 // pred_check_branch
        %234 = sbr.rel (%p231) target = $region12
      $region11: #{tpu_custom_call.1} parent=5 // pred_region
        %s235 = ssub.s32 %s21, 1
      $region12: #{tpu_custom_call.1} parent=5 // pred_fallthru
        _
      %p236 = scmp.lt.s32.totalorder %s21, 4
      // Predicated region
      $region13: #{tpu_custom_call.1} parent=5 // pred_check
        %p237 = pneg %p236
      $region14: #{tpu_custom_call.1} parent=5 // pred_check_branch
        %239 = sbr.rel (%p237) target = $region16
      $region15: #{tpu_custom_call.1} parent=5 // pred_region
        // Predicated region
        $region17: #{tpu_custom_call.1} parent=15 // pred_check
          %p240 = pneg %p55
        $region18: #{tpu_custom_call.1} parent=15 // pred_check_branch
          %242 = sbr.rel (%p240) target = $region20
        $region19: #{tpu_custom_call.1} parent=15 // pred_region
          %s243 = smul.u32 2, %s29
          %p244 = scmp.lt.s32.totalorder %s28, 3
          %s245 = scalar_select %p244, %s28, 3
          %p246 = scmp.lt.s32.totalorder %s243, 1
          %s247 = scalar_select %p246, %s243, 1
          %s248 = smul.addr %s247, 2
          %s249 = smul.addr %s245, 4
          %s250 = sadd.s32 %s248, %s249
          %s251 = smul.addr %s250, 4
          %s252 = scalar_lea.vmem %s0, %s251
          %s253 = smul.u32 2, %s29
        $region20: #{tpu_custom_call.1} parent=15 // pred_fallthru
          _
        // Predicated region
        $region21: #{tpu_custom_call.1} parent=15 // pred_check
          %p254 = pneg %p83
        $region22: #{tpu_custom_call.1} parent=15 // pred_check_branch
          %256 = sbr.rel (%p254) target = $region24
        $region23: #{tpu_custom_call.1} parent=15 // pred_region
          %s257 = smul.u32 2, %s29
          %p258 = scmp.lt.s32.totalorder %s28, 3
          %s259 = scalar_select %p258, %s28, 3
          %p260 = scmp.lt.s32.totalorder %s257, 1
          %s261 = scalar_select %p260, %s257, 1
          %s262 = smul.addr %s259, 2
          %s263 = sadd.s32 %s261, %s262
          %s264 = smul.addr %s263, 8
          %s265 = scalar_lea.vmem %s1, %s264
          %s266 = smul.u32 2, %s29
        $region24: #{tpu_custom_call.1} parent=15 // pred_fallthru
          _
        // Predicated region
        $region25: #{tpu_custom_call.1} parent=15 // pred_check
          %p267 = pneg %p109
        $region26: #{tpu_custom_call.1} parent=15 // pred_check_branch
          %269 = sbr.rel (%p267) target = $region28
        $region27: #{tpu_custom_call.1} parent=15 // pred_region
          %s270 = sand.u32 %s99, 1
          %s271 = scalar_lea.sflag [#allocation3], %s270
          %s272 = sand.u32 %s99, 1
          %s273 = smul.addr %s272, 256
          %s274 = scalar_lea.vmem [#allocation2], %s273
          %276 = vsyncadd %s271, 0
          %s277 = smul.addr %s28, 64
          %s278 = smul.addr %s277, 4
          %s279 = scalar_lea.hbm %s2, %s278
          %s280 = sshll.u32 %s279, 4
          %s281 = int_to_ptr.hbm [resolvable:$true] %s280
          %s282 = sshll.u32 %s274, 4
          %s283 = int_to_ptr.vmem [resolvable:$true] %s282
          %288 = dma.hbm_to_vmem [thread:$0]  %s281, 4096, %s283, %s271, 128, 128, 8
        $region28: #{tpu_custom_call.1} parent=15 // pred_fallthru
          _
        // Predicated region
        $region29: #{tpu_custom_call.1} parent=15 // pred_check
          %p289 = pneg %p135
        $region30: #{tpu_custom_call.1} parent=15 // pred_check_branch
          %291 = sbr.rel (%p289) target = $region32
        $region31: #{tpu_custom_call.1} parent=15 // pred_region
          %s292 = sand.u32 %s21, 1
          %s293 = scalar_lea.sflag [#allocation6], %s292
          %s294 = sand.u32 %s125, 1
          %s295 = smul.addr %s294, 2
          %s296 = scalar_lea.vmem [#allocation5], %s295
          %298 = vsyncadd %s293, 0
          %s299 = smul.addr %s28, 2
          %s300 = scalar_lea.hbm %s3, %s299
          %s302 = sshll.u32 %s300, 4
          %s303 = int_to_ptr.hbm [resolvable:$true] %s302
          %s304 = sshll.u32 %s296, 4
          %s305 = int_to_ptr.vmem [resolvable:$true] %s304
          %307 = dma.hbm_to_vmem [thread:$0]  %s303, 32, %s305, %s293
        $region32: #{tpu_custom_call.1} parent=15 // pred_fallthru
          _
        // Predicated region
        $region33: #{tpu_custom_call.1} parent=15 // pred_check
          %p308 = pneg %p161
        $region34: #{tpu_custom_call.1} parent=15 // pred_check_branch
          %310 = sbr.rel (%p308) target = $region36
        $region35: #{tpu_custom_call.1} parent=15 // pred_region
          %s311 = sand.u32 %s21, 1
          %s312 = scalar_lea.sflag [#allocation6], %s311
          %s313 = sand.u32 %s151, 1
          %s314 = smul.addr %s313, 256
          %s315 = scalar_lea.vmem [#allocation7], %s314
          %317 = vsyncadd %s312, 0
          %s318 = smul.addr %s28, 64
          %s319 = smul.addr %s318, 4
          %s320 = scalar_lea.hbm %s4, %s319
          %s321 = sshll.u32 %s320, 4
          %s322 = int_to_ptr.hbm [resolvable:$true] %s321
          %s323 = sshll.u32 %s315, 4
          %s324 = int_to_ptr.vmem [resolvable:$true] %s323
          %329 = dma.hbm_to_vmem [thread:$0]  %s322, 4096, %s324, %s312, 128, 128, 8
        $region36: #{tpu_custom_call.1} parent=15 // pred_fallthru
          _
        // Predicated region
        $region37: #{tpu_custom_call.1} parent=15 // pred_check
          %p330 = pneg %p187
        $region38: #{tpu_custom_call.1} parent=15 // pred_check_branch
          %332 = sbr.rel (%p330) target = $region40
        $region39: #{tpu_custom_call.1} parent=15 // pred_region
          %p333 = scmp.lt.s32.totalorder %s28, 3
          %s334 = scalar_select %p333, %s28, 3
          %s335 = smul.addr %s334, 2
          %s336 = scalar_lea.vmem %s5, %s335
        $region40: #{tpu_custom_call.1} parent=15 // pred_fallthru
          _
      $region16: #{tpu_custom_call.1} parent=5 // pred_fallthru
        _
      %p337 = scmp.le.s32.totalorder 1, %s21
      %p338 = scmp.lt.s32.totalorder %s21, 5
      %p339 = pnand %p337, %p338
      %p340 = pneg %p339
      // Predicated region
      $region41: #{tpu_custom_call.1} parent=5 // pred_check
        _
      $region42: #{tpu_custom_call.1} parent=5 // pred_check_branch
        %342 = sbr.rel (%p339) target = $region44
      $region43: #{tpu_custom_call.1} parent=5 // pred_region
        %s343 = ssub.s32 %s21, 1
        %s344 = sand.u32 %s102, 1
        %s345 = scalar_lea.sflag [#allocation3], %s344
        %s346 = sand.u32 %s102, 1
        %s347 = smul.addr %s346, 256
        %s348 = scalar_lea.vmem [#allocation2], %s347
        // Predicated region
        $region45: #{tpu_custom_call.1} parent=43 // pred_check
          %p349 = pneg %p115
        $region46: #{tpu_custom_call.1} parent=43 // pred_check_branch
          %351 = sbr.rel (%p349) target = $region48
        $region47: #{tpu_custom_call.1} parent=43 // pred_region
          %353 = dma.done %s345, 4096
        $region48: #{tpu_custom_call.1} parent=43 // pred_fallthru
          _
        %s354 = sand.u32 %s26, 1
        %s355 = scalar_lea.sflag [#allocation6], %s354
        %s356 = sand.u32 %s128, 1
        %s357 = smul.addr %s356, 2
        %s358 = scalar_lea.vmem [#allocation5], %s357
        // Predicated region
        $region49: #{tpu_custom_call.1} parent=43 // pred_check
          %p359 = pneg %p141
        $region50: #{tpu_custom_call.1} parent=43 // pred_check_branch
          %361 = sbr.rel (%p359) target = $region52
        $region51: #{tpu_custom_call.1} parent=43 // pred_region
          %363 = dma.done %s355, 32
        $region52: #{tpu_custom_call.1} parent=43 // pred_fallthru
          _
        %s364 = sand.u32 %s26, 1
        %s365 = scalar_lea.sflag [#allocation6], %s364
        %s366 = sand.u32 %s154, 1
        %s367 = smul.addr %s366, 256
        %s368 = scalar_lea.vmem [#allocation7], %s367
        // Predicated region
        $region53: #{tpu_custom_call.1} parent=43 // pred_check
          %p369 = pneg %p167
        $region54: #{tpu_custom_call.1} parent=43 // pred_check_branch
          %371 = sbr.rel (%p369) target = $region56
        $region55: #{tpu_custom_call.1} parent=43 // pred_region
          %373 = dma.done %s365, 4096
        $region56: #{tpu_custom_call.1} parent=43 // pred_fallthru
          _
        %s374 = smul.u32 2, %s31
        %p375 = scmp.lt.s32.totalorder %s30, 3
        %s376 = scalar_select %p375, %s30, 3
        %p377 = scmp.lt.s32.totalorder %s374, 1
        %s378 = scalar_select %p377, %s374, 1
        %s379 = smul.addr %s378, 2
        %s380 = smul.addr %s376, 4
        %s381 = sadd.s32 %s379, %s380
        %s382 = smul.addr %s381, 4
        %s383 = scalar_lea.vmem %s0, %s382
        %p384 = pneg %p61
        %p385 = pneg %p58
        %s386 = smul.u32 2, %s31
        %p387 = scmp.lt.s32.totalorder %s30, 3
        %s388 = scalar_select %p387, %s30, 3
        %p389 = scmp.lt.s32.totalorder %s386, 1
        %s390 = scalar_select %p389, %s386, 1
        %s391 = smul.addr %s388, 2
        %s392 = sadd.s32 %s390, %s391
        %s393 = smul.addr %s392, 8
        %s394 = scalar_lea.vmem %s1, %s393
        %p395 = pneg %p89
        %p396 = pneg %p86
        %s397 = sand.u32 %s102, 1
        %s398 = scalar_lea.sflag [#allocation3], %s397
        %s399 = sand.u32 %s102, 1
        %s400 = smul.addr %s399, 256
        %s401 = scalar_lea.vmem [#allocation2], %s400
        %p402 = pneg %p115
        %p403 = pneg %p112
        %s404 = sand.u32 %s26, 1
        %s405 = scalar_lea.sflag [#allocation6], %s404
        %s406 = sand.u32 %s128, 1
        %s407 = smul.addr %s406, 2
        %s408 = scalar_lea.vmem [#allocation5], %s407
        %p409 = pneg %p141
        %p410 = pneg %p138
        %s411 = sand.u32 %s26, 1
        %s412 = scalar_lea.sflag [#allocation6], %s411
        %s413 = sand.u32 %s154, 1
        %s414 = smul.addr %s413, 256
        %s415 = scalar_lea.vmem [#allocation7], %s414
        %p416 = pneg %p167
        %p417 = pneg %p164
        %p418 = scmp.lt.s32.totalorder %s30, 3
        %s419 = scalar_select %p418, %s30, 3
        %s420 = smul.addr %s419, 2
        %s421 = scalar_lea.vmem %s5, %s420
        %p422 = pneg %p193
        %p423 = pneg %p190
        %p424 = pneg %p221
        %p425 = pneg %p218
        %s426 = sand.u32 %s208, 1
        %s427 = scalar_lea.sflag [#allocation4], %s426
        %s428 = sand.u32 %s208, 1
        %s429 = smul.addr %s428, 16
        %s430 = scalar_lea.vmem [#allocation8], %s429
        %s431 = smul.u32 2, %s31
        %p432 = scmp.lt.s32.totalorder %s30, 3
        %s433 = scalar_select %p432, %s30, 3
        %p434 = scmp.lt.s32.totalorder %s431, 1
        %s435 = scalar_select %p434, %s431, 1
        %s436 = smul.addr %s435, 2
        %s437 = smul.addr %s433, 4
        %s438 = sadd.s32 %s436, %s437
        %s439 = smul.addr %s438, 4
        %s440 = scalar_lea.vmem %s0, %s439
        %s441 = smul.u32 2, %s31
        %s442 = smul.u32 2, %s31
        %p443 = scmp.lt.s32.totalorder %s30, 3
        %s444 = scalar_select %p443, %s30, 3
        %p445 = scmp.lt.s32.totalorder %s442, 1
        %s446 = scalar_select %p445, %s442, 1
        %s447 = smul.addr %s444, 2
        %s448 = sadd.s32 %s446, %s447
        %s449 = smul.addr %s448, 8
        %s450 = scalar_lea.vmem %s1, %s449
        %s451 = smul.u32 2, %s31
        %p452 = scmp.lt.s32.totalorder %s30, 3
        %s453 = scalar_select %p452, %s30, 3
        %s454 = smul.addr %s453, 2
        %s455 = scalar_lea.vmem %s5, %s454
        %s456 = smul.u32 2, %s31
        %v457 = vld [vmem:[%s440] sm:$0xff]
        %v458 = vld [vmem:[%s440 + $0x8] sm:$0xff]
        %v459 = vld [vmem:[%s348] sm:$0xff]
        %v460 = vld [vmem:[%s348 + $0x8] sm:$0xff]
        %v461 = vld [vmem:[%s348 + $0x10] sm:$0xff]
        %v462 = vld [vmem:[%s348 + $0x18] sm:$0xff]
        %v463 = vld [vmem:[%s348 + $0x20] sm:$0xff]
        %v464 = vld [vmem:[%s348 + $0x28] sm:$0xff]
        %v465 = vld [vmem:[%s348 + $0x30] sm:$0xff]
        %v466 = vld [vmem:[%s348 + $0x38] sm:$0xff]
        %v467 = vld [vmem:[%s348 + $0x40] sm:$0xff]
        %v468 = vld [vmem:[%s348 + $0x48] sm:$0xff]
        %v469 = vld [vmem:[%s348 + $0x50] sm:$0xff]
        %v470 = vld [vmem:[%s348 + $0x58] sm:$0xff]
        %v471 = vld [vmem:[%s348 + $0x60] sm:$0xff]
        %v472 = vld [vmem:[%s348 + $0x68] sm:$0xff]
        %v473 = vld [vmem:[%s348 + $0x70] sm:$0xff]
        %v474 = vld [vmem:[%s348 + $0x78] sm:$0xff]
        %v475 = vld [vmem:[%s348 + $0x80] sm:$0xff]
        %v476 = vld [vmem:[%s348 + $0x88] sm:$0xff]
        %v477 = vld [vmem:[%s348 + $0x90] sm:$0xff]
        %v478 = vld [vmem:[%s348 + $0x98] sm:$0xff]
        %v479 = vld [vmem:[%s348 + $0xa0] sm:$0xff]
        %v480 = vld [vmem:[%s348 + $0xa8] sm:$0xff]
        %v481 = vld [vmem:[%s348 + $0xb0] sm:$0xff]
        %v482 = vld [vmem:[%s348 + $0xb8] sm:$0xff]
        %v483 = vld [vmem:[%s348 + $0xc0] sm:$0xff]
        %v484 = vld [vmem:[%s348 + $0xc8] sm:$0xff]
        %v485 = vld [vmem:[%s348 + $0xd0] sm:$0xff]
        %v486 = vld [vmem:[%s348 + $0xd8] sm:$0xff]
        %v487 = vld [vmem:[%s348 + $0xe0] sm:$0xff]
        %v488 = vld [vmem:[%s348 + $0xe8] sm:$0xff]
        %v489 = vld [vmem:[%s348 + $0xf0] sm:$0xff]
        %v490 = vld [vmem:[%s348 + $0xf8] sm:$0xff]
        %v491 = vld [vmem:[%s358] sm:$0x3]
        %v493 = vperm.slane %v491, 0
        %v494 = vperm.slane %v491, 1
        %v499 = vunpack.c.l.b16 %v457
        %v500 = vunpack.c.h.b16 %v457
        %v501 = vunpack.c.l.b16 %v458
        %v502 = vunpack.c.h.b16 %v458
        %v503 = vpack.c.b16 %v501, %v499
        %v504 = vpack.c.b16 %v502, %v500
        %v539 = vunpack.c.l.b16 %v459
        %v540 = vunpack.c.h.b16 %v459
        %v541 = vunpack.c.l.b16 %v460
        %v542 = vunpack.c.h.b16 %v460
        %v543 = vunpack.c.l.b16 %v461
        %v544 = vunpack.c.h.b16 %v461
        %v545 = vunpack.c.l.b16 %v462
        %v546 = vunpack.c.h.b16 %v462
        %v547 = vunpack.c.l.b16 %v463
        %v548 = vunpack.c.h.b16 %v463
        %v549 = vunpack.c.l.b16 %v464
        %v550 = vunpack.c.h.b16 %v464
        %v551 = vunpack.c.l.b16 %v465
        %v552 = vunpack.c.h.b16 %v465
        %v553 = vunpack.c.l.b16 %v466
        %v554 = vunpack.c.h.b16 %v466
        %v555 = vunpack.c.l.b16 %v467
        %v556 = vunpack.c.h.b16 %v467
        %v557 = vunpack.c.l.b16 %v468
        %v558 = vunpack.c.h.b16 %v468
        %v559 = vunpack.c.l.b16 %v469
        %v560 = vunpack.c.h.b16 %v469
        %v561 = vunpack.c.l.b16 %v470
        %v562 = vunpack.c.h.b16 %v470
        %v563 = vunpack.c.l.b16 %v471
        %v564 = vunpack.c.h.b16 %v471
        %v565 = vunpack.c.l.b16 %v472
        %v566 = vunpack.c.h.b16 %v472
        %v567 = vunpack.c.l.b16 %v473
        %v568 = vunpack.c.h.b16 %v473
        %v569 = vunpack.c.l.b16 %v474
        %v570 = vunpack.c.h.b16 %v474
        %v571 = vunpack.c.l.b16 %v475
        %v572 = vunpack.c.h.b16 %v475
        %v573 = vunpack.c.l.b16 %v476
        %v574 = vunpack.c.h.b16 %v476
        %v575 = vunpack.c.l.b16 %v477
        %v576 = vunpack.c.h.b16 %v477
        %v577 = vunpack.c.l.b16 %v478
        %v578 = vunpack.c.h.b16 %v478
        %v579 = vunpack.c.l.b16 %v479
        %v580 = vunpack.c.h.b16 %v479
        %v581 = vunpack.c.l.b16 %v480
        %v582 = vunpack.c.h.b16 %v480
        %v583 = vunpack.c.l.b16 %v481
        %v584 = vunpack.c.h.b16 %v481
        %v585 = vunpack.c.l.b16 %v482
        %v586 = vunpack.c.h.b16 %v482
        %v587 = vunpack.c.l.b16 %v483
        %v588 = vunpack.c.h.b16 %v483
        %v589 = vunpack.c.l.b16 %v484
        %v590 = vunpack.c.h.b16 %v484
        %v591 = vunpack.c.l.b16 %v485
        %v592 = vunpack.c.h.b16 %v485
        %v593 = vunpack.c.l.b16 %v486
        %v594 = vunpack.c.h.b16 %v486
        %v595 = vunpack.c.l.b16 %v487
        %v596 = vunpack.c.h.b16 %v487
        %v597 = vunpack.c.l.b16 %v488
        %v598 = vunpack.c.h.b16 %v488
        %v599 = vunpack.c.l.b16 %v489
        %v600 = vunpack.c.h.b16 %v489
        %v601 = vunpack.c.l.b16 %v490
        %v602 = vunpack.c.h.b16 %v490
        %v603 = vpack.c.b16 %v541, %v539
        %v604 = vpack.c.b16 %v542, %v540
        %v605 = vpack.c.b16 %v545, %v543
        %v606 = vpack.c.b16 %v546, %v544
        %v607 = vpack.c.b16 %v549, %v547
        %v608 = vpack.c.b16 %v550, %v548
        %v609 = vpack.c.b16 %v553, %v551
        %v610 = vpack.c.b16 %v554, %v552
        %v611 = vpack.c.b16 %v557, %v555
        %v612 = vpack.c.b16 %v558, %v556
        %v613 = vpack.c.b16 %v561, %v559
        %v614 = vpack.c.b16 %v562, %v560
        %v615 = vpack.c.b16 %v565, %v563
        %v616 = vpack.c.b16 %v566, %v564
        %v617 = vpack.c.b16 %v569, %v567
        %v618 = vpack.c.b16 %v570, %v568
        %v619 = vpack.c.b16 %v573, %v571
        %v620 = vpack.c.b16 %v574, %v572
        %v621 = vpack.c.b16 %v577, %v575
        %v622 = vpack.c.b16 %v578, %v576
        %v623 = vpack.c.b16 %v581, %v579
        %v624 = vpack.c.b16 %v582, %v580
        %v625 = vpack.c.b16 %v585, %v583
        %v626 = vpack.c.b16 %v586, %v584
        %v627 = vpack.c.b16 %v589, %v587
        %v628 = vpack.c.b16 %v590, %v588
        %v629 = vpack.c.b16 %v593, %v591
        %v630 = vpack.c.b16 %v594, %v592
        %v631 = vpack.c.b16 %v597, %v595
        %v632 = vpack.c.b16 %v598, %v596
        %v633 = vpack.c.b16 %v601, %v599
        %v634 = vpack.c.b16 %v602, %v600
        %667 = vmatpush.bf16.msra.mxu0 %v617
        %668 = vmatpush.bf16.msra.mxu0 %v615
        %669 = vmatpush.bf16.msra.mxu0 %v613
        %670 = vmatpush.bf16.msra.mxu0 %v611
        %671 = vmatpush.bf16.msra.mxu0 %v609
        %672 = vmatpush.bf16.msra.mxu0 %v607
        %673 = vmatpush.bf16.msra.mxu0 %v605
        %674 = vmatpush.bf16.msra.mxu0 %v603
        %675 = vmatmul.bf16.gmra.mxu0 %v503
        %v676 = vpop.f32.mrf.mxu0
        %v677 = vadd.f32 %v493, %v676
        %v678 = vpop.f32.mrf.mxu0
        %v679 = vadd.f32 %v493, %v678
        %680 = vdwg.mxu0
        %681 = vmatpush.bf16.msra.mxu0 %v633
        %682 = vmatpush.bf16.msra.mxu0 %v631
        %683 = vmatpush.bf16.msra.mxu0 %v629
        %684 = vmatpush.bf16.msra.mxu0 %v627
        %685 = vmatpush.bf16.msra.mxu0 %v625
        %686 = vmatpush.bf16.msra.mxu0 %v623
        %687 = vmatpush.bf16.msra.mxu0 %v621
        %688 = vmatpush.bf16.msra.mxu0 %v619
        %689 = vmatmul.bf16.gmra.mxu0 %v504
        %v690 = vpop.f32.mrf.mxu0
        %v691 = vadd.f32 %v677, %v690
        %v692 = vpop.f32.mrf.mxu0
        %v693 = vadd.f32 %v679, %v692
        %694 = vdwg.mxu0
        %695 = vmatpush.bf16.msra.mxu0 %v618
        %696 = vmatpush.bf16.msra.mxu0 %v616
        %697 = vmatpush.bf16.msra.mxu0 %v614
        %698 = vmatpush.bf16.msra.mxu0 %v612
        %699 = vmatpush.bf16.msra.mxu0 %v610
        %700 = vmatpush.bf16.msra.mxu0 %v608
        %701 = vmatpush.bf16.msra.mxu0 %v606
        %702 = vmatpush.bf16.msra.mxu0 %v604
        %703 = vmatmul.bf16.gmra.mxu0 %v503
        %v704 = vpop.f32.mrf.mxu0
        %v705 = vadd.f32 %v494, %v704
        %v706 = vpop.f32.mrf.mxu0
        %v707 = vadd.f32 %v494, %v706
        %708 = vdwg.mxu0
        %709 = vmatpush.bf16.msra.mxu0 %v634
        %710 = vmatpush.bf16.msra.mxu0 %v632
        %711 = vmatpush.bf16.msra.mxu0 %v630
        %712 = vmatpush.bf16.msra.mxu0 %v628
        %713 = vmatpush.bf16.msra.mxu0 %v626
        %714 = vmatpush.bf16.msra.mxu0 %v624
        %715 = vmatpush.bf16.msra.mxu0 %v622
        %716 = vmatpush.bf16.msra.mxu0 %v620
        %717 = vmatmul.bf16.gmra.mxu0 %v504
        %v718 = vpop.f32.mrf.mxu0
        %v719 = vadd.f32 %v705, %v718
        %v720 = vpop.f32.mrf.mxu0
        %v721 = vadd.f32 %v707, %v720
        %722 = vdwg.mxu0
        %v723 = vmax.f32 %v691, 0.0
        %v724 = vmax.f32 %v719, 0.0
        %v725 = vmax.f32 %v693, 0.0
        %v726 = vmax.f32 %v721, 0.0
        %v727 = vpack.c.bf16 %v725, %v723
        %v728 = vpack.c.bf16 %v726, %v724
        %v729 = vld [vmem:[%s368] sm:$0xff]
        %v730 = vld [vmem:[%s368 + $0x8] sm:$0xff]
        %v731 = vld [vmem:[%s368 + $0x10] sm:$0xff]
        %v732 = vld [vmem:[%s368 + $0x18] sm:$0xff]
        %v733 = vld [vmem:[%s368 + $0x20] sm:$0xff]
        %v734 = vld [vmem:[%s368 + $0x28] sm:$0xff]
        %v735 = vld [vmem:[%s368 + $0x30] sm:$0xff]
        %v736 = vld [vmem:[%s368 + $0x38] sm:$0xff]
        %v737 = vld [vmem:[%s368 + $0x40] sm:$0xff]
        %v738 = vld [vmem:[%s368 + $0x48] sm:$0xff]
        %v739 = vld [vmem:[%s368 + $0x50] sm:$0xff]
        %v740 = vld [vmem:[%s368 + $0x58] sm:$0xff]
        %v741 = vld [vmem:[%s368 + $0x60] sm:$0xff]
        %v742 = vld [vmem:[%s368 + $0x68] sm:$0xff]
        %v743 = vld [vmem:[%s368 + $0x70] sm:$0xff]
        %v744 = vld [vmem:[%s368 + $0x78] sm:$0xff]
        %v745 = vld [vmem:[%s368 + $0x80] sm:$0xff]
        %v746 = vld [vmem:[%s368 + $0x88] sm:$0xff]
        %v747 = vld [vmem:[%s368 + $0x90] sm:$0xff]
        %v748 = vld [vmem:[%s368 + $0x98] sm:$0xff]
        %v749 = vld [vmem:[%s368 + $0xa0] sm:$0xff]
        %v750 = vld [vmem:[%s368 + $0xa8] sm:$0xff]
        %v751 = vld [vmem:[%s368 + $0xb0] sm:$0xff]
        %v752 = vld [vmem:[%s368 + $0xb8] sm:$0xff]
        %v753 = vld [vmem:[%s368 + $0xc0] sm:$0xff]
        %v754 = vld [vmem:[%s368 + $0xc8] sm:$0xff]
        %v755 = vld [vmem:[%s368 + $0xd0] sm:$0xff]
        %v756 = vld [vmem:[%s368 + $0xd8] sm:$0xff]
        %v757 = vld [vmem:[%s368 + $0xe0] sm:$0xff]
        %v758 = vld [vmem:[%s368 + $0xe8] sm:$0xff]
        %v759 = vld [vmem:[%s368 + $0xf0] sm:$0xff]
        %v760 = vld [vmem:[%s368 + $0xf8] sm:$0xff]
        %v761 = vld [vmem:[%s455] sm:$0x3]
        %v763 = vperm.slane %v761, 0
        %v764 = vperm.slane %v761, 1
        %v799 = vunpack.c.l.b16 %v729
        %v800 = vunpack.c.h.b16 %v729
        %v801 = vunpack.c.l.b16 %v730
        %v802 = vunpack.c.h.b16 %v730
        %v803 = vunpack.c.l.b16 %v731
        %v804 = vunpack.c.h.b16 %v731
        %v805 = vunpack.c.l.b16 %v732
        %v806 = vunpack.c.h.b16 %v732
        %v807 = vunpack.c.l.b16 %v733
        %v808 = vunpack.c.h.b16 %v733
        %v809 = vunpack.c.l.b16 %v734
        %v810 = vunpack.c.h.b16 %v734
        %v811 = vunpack.c.l.b16 %v735
        %v812 = vunpack.c.h.b16 %v735
        %v813 = vunpack.c.l.b16 %v736
        %v814 = vunpack.c.h.b16 %v736
        %v815 = vunpack.c.l.b16 %v737
        %v816 = vunpack.c.h.b16 %v737
        %v817 = vunpack.c.l.b16 %v738
        %v818 = vunpack.c.h.b16 %v738
        %v819 = vunpack.c.l.b16 %v739
        %v820 = vunpack.c.h.b16 %v739
        %v821 = vunpack.c.l.b16 %v740
        %v822 = vunpack.c.h.b16 %v740
        %v823 = vunpack.c.l.b16 %v741
        %v824 = vunpack.c.h.b16 %v741
        %v825 = vunpack.c.l.b16 %v742
        %v826 = vunpack.c.h.b16 %v742
        %v827 = vunpack.c.l.b16 %v743
        %v828 = vunpack.c.h.b16 %v743
        %v829 = vunpack.c.l.b16 %v744
        %v830 = vunpack.c.h.b16 %v744
        %v831 = vunpack.c.l.b16 %v745
        %v832 = vunpack.c.h.b16 %v745
        %v833 = vunpack.c.l.b16 %v746
        %v834 = vunpack.c.h.b16 %v746
        %v835 = vunpack.c.l.b16 %v747
        %v836 = vunpack.c.h.b16 %v747
        %v837 = vunpack.c.l.b16 %v748
        %v838 = vunpack.c.h.b16 %v748
        %v839 = vunpack.c.l.b16 %v749
        %v840 = vunpack.c.h.b16 %v749
        %v841 = vunpack.c.l.b16 %v750
        %v842 = vunpack.c.h.b16 %v750
        %v843 = vunpack.c.l.b16 %v751
        %v844 = vunpack.c.h.b16 %v751
        %v845 = vunpack.c.l.b16 %v752
        %v846 = vunpack.c.h.b16 %v752
        %v847 = vunpack.c.l.b16 %v753
        %v848 = vunpack.c.h.b16 %v753
        %v849 = vunpack.c.l.b16 %v754
        %v850 = vunpack.c.h.b16 %v754
        %v851 = vunpack.c.l.b16 %v755
        %v852 = vunpack.c.h.b16 %v755
        %v853 = vunpack.c.l.b16 %v756
        %v854 = vunpack.c.h.b16 %v756
        %v855 = vunpack.c.l.b16 %v757
        %v856 = vunpack.c.h.b16 %v757
        %v857 = vunpack.c.l.b16 %v758
        %v858 = vunpack.c.h.b16 %v758
        %v859 = vunpack.c.l.b16 %v759
        %v860 = vunpack.c.h.b16 %v759
        %v861 = vunpack.c.l.b16 %v760
        %v862 = vunpack.c.h.b16 %v760
        %v863 = vpack.c.b16 %v801, %v799
        %v864 = vpack.c.b16 %v802, %v800
        %v865 = vpack.c.b16 %v805, %v803
        %v866 = vpack.c.b16 %v806, %v804
        %v867 = vpack.c.b16 %v809, %v807
        %v868 = vpack.c.b16 %v810, %v808
        %v869 = vpack.c.b16 %v813, %v811
        %v870 = vpack.c.b16 %v814, %v812
        %v871 = vpack.c.b16 %v817, %v815
        %v872 = vpack.c.b16 %v818, %v816
        %v873 = vpack.c.b16 %v821, %v819
        %v874 = vpack.c.b16 %v822, %v820
        %v875 = vpack.c.b16 %v825, %v823
        %v876 = vpack.c.b16 %v826, %v824
        %v877 = vpack.c.b16 %v829, %v827
        %v878 = vpack.c.b16 %v830, %v828
        %v879 = vpack.c.b16 %v833, %v831
        %v880 = vpack.c.b16 %v834, %v832
        %v881 = vpack.c.b16 %v837, %v835
        %v882 = vpack.c.b16 %v838, %v836
        %v883 = vpack.c.b16 %v841, %v839
        %v884 = vpack.c.b16 %v842, %v840
        %v885 = vpack.c.b16 %v845, %v843
        %v886 = vpack.c.b16 %v846, %v844
        %v887 = vpack.c.b16 %v849, %v847
        %v888 = vpack.c.b16 %v850, %v848
        %v889 = vpack.c.b16 %v853, %v851
        %v890 = vpack.c.b16 %v854, %v852
        %v891 = vpack.c.b16 %v857, %v855
        %v892 = vpack.c.b16 %v858, %v856
        %v893 = vpack.c.b16 %v861, %v859
        %v894 = vpack.c.b16 %v862, %v860
        %927 = vmatpush.bf16.msra.mxu0 %v877
        %928 = vmatpush.bf16.msra.mxu0 %v875
        %929 = vmatpush.bf16.msra.mxu0 %v873
        %930 = vmatpush.bf16.msra.mxu0 %v871
        %931 = vmatpush.bf16.msra.mxu0 %v869
        %932 = vmatpush.bf16.msra.mxu0 %v867
        %933 = vmatpush.bf16.msra.mxu0 %v865
        %934 = vmatpush.bf16.msra.mxu0 %v863
        %935 = vmatmul.bf16.gmra.mxu0 %v727
        %v936 = vpop.f32.mrf.mxu0
        %v937 = vadd.f32 %v763, %v936
        %v938 = vpop.f32.mrf.mxu0
        %v939 = vadd.f32 %v763, %v938
        %940 = vdwg.mxu0
        %941 = vmatpush.bf16.msra.mxu0 %v893
        %942 = vmatpush.bf16.msra.mxu0 %v891
        %943 = vmatpush.bf16.msra.mxu0 %v889
        %944 = vmatpush.bf16.msra.mxu0 %v887
        %945 = vmatpush.bf16.msra.mxu0 %v885
        %946 = vmatpush.bf16.msra.mxu0 %v883
        %947 = vmatpush.bf16.msra.mxu0 %v881
        %948 = vmatpush.bf16.msra.mxu0 %v879
        %949 = vmatmul.bf16.gmra.mxu0 %v728
        %v950 = vpop.f32.mrf.mxu0
        %v951 = vadd.f32 %v937, %v950
        %v952 = vpop.f32.mrf.mxu0
        %v953 = vadd.f32 %v939, %v952
        %954 = vdwg.mxu0
        %955 = vmatpush.bf16.msra.mxu0 %v878
        %956 = vmatpush.bf16.msra.mxu0 %v876
        %957 = vmatpush.bf16.msra.mxu0 %v874
        %958 = vmatpush.bf16.msra.mxu0 %v872
        %959 = vmatpush.bf16.msra.mxu0 %v870
        %960 = vmatpush.bf16.msra.mxu0 %v868
        %961 = vmatpush.bf16.msra.mxu0 %v866
        %962 = vmatpush.bf16.msra.mxu0 %v864
        %963 = vmatmul.bf16.gmra.mxu0 %v727
        %v964 = vpop.f32.mrf.mxu0
        %v965 = vadd.f32 %v764, %v964
        %v966 = vpop.f32.mrf.mxu0
        %v967 = vadd.f32 %v764, %v966
        %968 = vdwg.mxu0
        %969 = vmatpush.bf16.msra.mxu0 %v894
        %970 = vmatpush.bf16.msra.mxu0 %v892
        %971 = vmatpush.bf16.msra.mxu0 %v890
        %972 = vmatpush.bf16.msra.mxu0 %v888
        %973 = vmatpush.bf16.msra.mxu0 %v886
        %974 = vmatpush.bf16.msra.mxu0 %v884
        %975 = vmatpush.bf16.msra.mxu0 %v882
        %976 = vmatpush.bf16.msra.mxu0 %v880
        %977 = vmatmul.bf16.gmra.mxu0 %v728
        %v978 = vpop.f32.mrf.mxu0
        %v979 = vadd.f32 %v965, %v978
        %v980 = vpop.f32.mrf.mxu0
        %v981 = vadd.f32 %v967, %v980
        %982 = vdwg.mxu0
        %v983 = vld [vmem:[%s450] sm:$0xff]
        %v984 = vld [vmem:[%s450 + $0x8] sm:$0xff]
        %986 = vset.pattern.permute.xlu0 0
        %987 = vperm.xlu0 %986, %v983
        %v988 = vpop.permute.xlu0 %987
        %991 = vset.pattern.permute.xlu0 0
        %992 = vperm.xlu0 %991, %v984
        %v993 = vpop.permute.xlu0 %992
        %v995 = vmul.f32 %v951, %v988
        %v996 = vmul.f32 %v979, %v988
        %v997 = vmul.f32 %v953, %v993
        %v998 = vmul.f32 %v981, %v993
        %v999 = vpack.c.bf16 %v996, %v995
        %v1000 = vpack.c.bf16 %v998, %v997
        %1001 = vst [vmem:[%s430] sm:$0xff] %v999
        %1002 = vst [vmem:[%s430 + $0x8] sm:$0xff] %v1000
        %s1003 = sand.u32 %s208, 1
        %s1004 = scalar_lea.sflag [#allocation4], %s1003
        %s1005 = sand.u32 %s208, 1
        %s1006 = smul.addr %s1005, 16
        %s1007 = scalar_lea.vmem [#allocation8], %s1006
        // Predicated region
        $region57: #{tpu_custom_call.1} parent=43 // pred_check
          %p1008 = pneg %p218
        $region58: #{tpu_custom_call.1} parent=43 // pred_check_branch
          %1010 = sbr.rel (%p1008) target = $region60
        $region59: #{tpu_custom_call.1} parent=43 // pred_region
          %s1011 = smul.u32 2, %s31
          %1013 = vsyncadd %s1004, 0
          %s1014 = smul.addr %s1011, 2
          %s1015 = smul.addr %s30, 4
          %s1016 = sadd.s32 %s1014, %s1015
          %s1017 = smul.addr %s1016, 4
          %s1018 = scalar_lea.hbm %s6, %s1017
          %s1019 = sshll.u32 %s1007, 4
          %s1020 = int_to_ptr.vmem [resolvable:$true] %s1019
          %s1021 = sshll.u32 %s1018, 4
          %s1022 = int_to_ptr.hbm [resolvable:$true] %s1021
          %1027 = dma.vmem_to_hbm [thread:$0]  %s1020, 256, %s1022, %s1004, 128, 128, 8
        $region60: #{tpu_custom_call.1} parent=43 // pred_fallthru
          _
      $region44: #{tpu_custom_call.1} parent=5 // pred_fallthru
        _
      %p1028 = scmp.le.s32.totalorder 2, %s21
      // Predicated region
      $region61: #{tpu_custom_call.1} parent=5 // pred_check
        %p1029 = pneg %p1028
      $region62: #{tpu_custom_call.1} parent=5 // pred_check_branch
        %1031 = sbr.rel (%p1029) target = $region64
      $region63: #{tpu_custom_call.1} parent=5 // pred_region
        %s1032 = ssub.s32 %s21, 2
        // Predicated region
        $region65: #{tpu_custom_call.1} parent=63 // pred_check
          %p1033 = pneg %p224
        $region66: #{tpu_custom_call.1} parent=63 // pred_check_branch
          %1035 = sbr.rel (%p1033) target = $region68
        $region67: #{tpu_custom_call.1} parent=63 // pred_region
          %s1036 = sand.u32 %s209, 1
          %s1037 = scalar_lea.sflag [#allocation4], %s1036
          %s1038 = sand.u32 %s209, 1
          %s1039 = smul.addr %s1038, 16
          %s1040 = scalar_lea.vmem [#allocation8], %s1039
          %1042 = dma.done %s1037, 256
        $region68: #{tpu_custom_call.1} parent=63 // pred_fallthru
          _
      $region64: #{tpu_custom_call.1} parent=5 // pred_fallthru
        _
    $region6: #{tpu_custom_call.1} parent=1 // loop_footer
      %s25 = sadd.s32 1, %s21
    $region7: #{tpu_custom_call.1} parent=1 // loop_footer_branch
      %20 = sbr.rel target = $region3
    $region8: #{tpu_custom_call.1} parent=1 // loop_exit
      _
    %1043 = vsyncpa [#allocation3], 1
    %s1044 = scalar_lea.sflag [#allocation3], 1
    %1045 = vsyncpa %s1044, 1
    %1046 = vsyncpa [#allocation6], 1
    %s1047 = scalar_lea.sflag [#allocation6], 1
    %1048 = vsyncpa %s1047, 1
    %1049 = vsyncpa [#allocation4], 1
    %s1050 = scalar_lea.sflag [#allocation4], 1
    %1051 = vsyncpa %s1050, 1

</llo_original>
